<compile_context>
chip_gen: v7x
topology: tpu7x:2x2x1
jax: 0.10.0
libtpu: 0.0.40
codegen_flags: <defaults>
</compile_context>

<pallas_src>
import jax
import jax.numpy as jnp
from jax.experimental import pallas as pl
from jax.experimental.pallas import tpu as pltpu

AUTOENCODER_ENCODING_DIM = 5
_LANE = 128


def _round_up(n, m):
    return ((n + m - 1) // m) * m


def _autoencoder_kernel(x_ref, w1_ref, b1_ref, w2_ref, b2_ref, z_ref, xr_ref):
    x = x_ref[...]                                                   # [TB, D] f32
    # Encoder: Linear(D -> E_pad) + ReLU. E is zero-padded to lane width 128
    # internally so both matmuls get a real lane-dense K/N dim; padded columns
    # are exactly zero after ReLU, so the math is unchanged.
    pre_z = jnp.dot(x, w1_ref[...], preferred_element_type=jnp.float32) + b1_ref[...]
    z_pad = jnp.maximum(pre_z, 0.0)                                  # [TB, E_pad]
    # Only the first E columns go back to HBM (masked vst, but ~25x less DMA
    # than writing the padded block).
    z_ref[...] = z_pad[:, : z_ref.shape[-1]].astype(z_ref.dtype)
    # Decoder: Linear(E_pad -> D) + Sigmoid (padded rows of w2 are zero).
    pre_x = jnp.dot(z_pad, w2_ref[...], preferred_element_type=jnp.float32) + b2_ref[...]
    xr_ref[...] = jax.nn.sigmoid(pre_x).astype(xr_ref.dtype)         # exp/recip on EUP


def pad_params(w1, b1, w2, b2):
    """Pad encoder/decoder params along E to lane width once, at init time.

    w1: [D, E], b1: [1, E] or [E], w2: [E, D], b2: [1, D] or [D].
    Returns (w1p, b1p, w2p, b2p, E) with E zero-padded to E_pad = 128*k.
    Padded z columns are 0 after ReLU and padded w2 rows are 0, so results
    are bit-identical to the unpadded math.
    """
    f32 = jnp.float32
    D, E = w1.shape
    E_pad = max(_LANE, _round_up(E, _LANE))
    w1p = jnp.zeros((D, E_pad), f32).at[:, :E].set(w1.astype(f32))
    b1p = jnp.zeros((1, E_pad), f32).at[:, :E].set(jnp.asarray(b1, f32).reshape(1, E))
    w2p = jnp.zeros((E_pad, D), f32).at[:E, :].set(w2.astype(f32))
    b2p = jnp.asarray(b2, f32).reshape(1, D)
    return w1p, b1p, w2p, b2p, E


def _batch_tile(B, batch_tile):
    # >=2 grid steps once B is big enough (keeps both v7x TensorCores busy),
    # tile a multiple of 8 sublanes, and TB <= batch_tile.
    if B < 16:
        return B
    n_steps = max(2, pl.cdiv(B, batch_tile))
    return _round_up(pl.cdiv(B, n_steps), 8)


def autoencoder_forward(x, w1p, b1p, w2p, b2p, encoding_dim, *, batch_tile=2048):
    """x: [B, D]; padded params from pad_params(). Returns (z [B,E], x_recon [B,D])."""
    f32 = jnp.float32
    x = x.astype(f32)
    B, D = x.shape
    E = int(encoding_dim)
    E_pad = w1p.shape[1]

    TB = _batch_tile(B, batch_tile)
    grid = (pl.cdiv(B, TB),)

    # VMEM budget from actual need (double-buffered IO tiles + resident weights
    # + the padded-z intermediate), ~2x headroom, small floor for compiler scratch.
    io_tile_bytes = 2 * TB * (D + E + D) * 4
    weight_bytes = (D * E_pad + E_pad + E_pad * D + D) * 4
    scratch_bytes = 2 * TB * E_pad * 4
    vmem_limit = int(max(2 << 20, 2 * (io_tile_bytes + 2 * weight_bytes + scratch_bytes)))

    cost = pl.CostEstimate(
        flops=4 * B * D * E_pad,                       # two matmuls (padded K/N)
        transcendentals=B * D,                         # sigmoid exp
        bytes_accessed=2 * B * D * 4 + B * E * 4 + weight_bytes,
    )

    z, x_recon = pl.pallas_call(
        _autoencoder_kernel,
        out_shape=(
            jax.ShapeDtypeStruct((B, E), f32),
            jax.ShapeDtypeStruct((B, D), f32),
        ),
        grid=grid,
        in_specs=[
            pl.BlockSpec((TB, D), lambda i: (i, 0)),        # x: batch-tiled
            pl.BlockSpec((D, E_pad), lambda i: (0, 0)),     # w1: resident
            pl.BlockSpec((1, E_pad), lambda i: (0, 0)),     # b1: resident
            pl.BlockSpec((E_pad, D), lambda i: (0, 0)),     # w2: resident
            pl.BlockSpec((1, D), lambda i: (0, 0)),         # b2: resident
        ],
        out_specs=(
            pl.BlockSpec((TB, E), lambda i: (i, 0)),        # z: unpadded
            pl.BlockSpec((TB, D), lambda i: (i, 0)),        # x_recon
        ),
        compiler_params=pltpu.CompilerParams(
            dimension_semantics=("parallel",),              # independent batch tiles
            vmem_limit_bytes=vmem_limit,
        ),
        cost_estimate=cost,
    )(x, w1p, b1p, w2p, b2p)

    return z, x_recon


def init_params(key, input_dim, encoding_dim=AUTOENCODER_ENCODING_DIM):
    """Deterministic init mimicking nn.Linear's U(-1/sqrt(fan_in), 1/sqrt(fan_in))."""
    k1, k2, k3, k4 = jax.random.split(key, 4)
    lim1 = 1.0 / jnp.sqrt(jnp.float32(input_dim))
    lim2 = 1.0 / jnp.sqrt(jnp.float32(encoding_dim))
    # Stored as [in, out] (transposed vs PyTorch's [out, in]).
    w1 = jax.random.uniform(k1, (input_dim, encoding_dim), jnp.float32, -lim1, lim1)
    b1 = jax.random.uniform(k2, (1, encoding_dim), jnp.float32, -lim1, lim1)
    w2 = jax.random.uniform(k3, (encoding_dim, input_dim), jnp.float32, -lim2, lim2)
    b2 = jax.random.uniform(k4, (1, input_dim), jnp.float32, -lim2, lim2)
    return w1, b1, w2, b2


if __name__ == "__main__":
    key = jax.random.PRNGKey(0)
    k_x, k_x2, k_p = jax.random.split(key, 3)

    input_dim = 32
    encoding_dim = AUTOENCODER_ENCODING_DIM

    w1, b1, w2, b2 = init_params(k_p, input_dim, encoding_dim)
    # Pad once at init (hoisted out of the per-call wrapper).
    w1p, b1p, w2p, b2p, E = pad_params(w1, b1, w2, b2)

    def reference(xx):
        z_ref = jnp.maximum(xx @ w1 + b1, 0.0)
        return z_ref, jax.nn.sigmoid(z_ref @ w2 + b2)

    # Case 1: small batch, single grid step.
    batch = 8
    x = jax.random.uniform(k_x, (batch, input_dim), jnp.float32)
    z, x_recon = autoencoder_forward(x, w1p, b1p, w2p, b2p, E)
    jax.block_until_ready((z, x_recon))
    z_r, xr_r = reference(x)
    assert z.shape == (batch, encoding_dim)
    assert x_recon.shape == (batch, input_dim)
    assert jnp.allclose(z, z_r, atol=1e-5)
    assert jnp.allclose(x_recon, xr_r, atol=1e-5)

    # Case 2: B not a multiple of the tile (exercises the padded partial tile
    # and the >=2-step grid path).
    batch2 = 20
    x2 = jax.random.uniform(k_x2, (batch2, input_dim), jnp.float32)
    z2, x_recon2 = autoencoder_forward(x2, w1p, b1p, w2p, b2p, E, batch_tile=8)
    jax.block_until_ready((z2, x_recon2))
    z2_r, xr2_r = reference(x2)
    assert z2.shape == (batch2, encoding_dim)
    assert x_recon2.shape == (batch2, input_dim)
    assert jnp.allclose(z2, z2_r, atol=1e-5)
    assert jnp.allclose(x_recon2, xr2_r, atol=1e-5)

    print("KERNEL_OK")
</pallas_src>

<mosaic_0001>
module attributes {stable_mosaic.version = 11 : i64} {
  func.func @_autoencoder_kernel(%arg0: i32, %arg1: memref<8x32xf32, #tpu.memory_space<vmem>>, %arg2: memref<32x128xf32, #tpu.memory_space<vmem>>, %arg3: memref<1x128xf32, #tpu.memory_space<vmem>>, %arg4: memref<128x32xf32, #tpu.memory_space<vmem>>, %arg5: memref<1x32xf32, #tpu.memory_space<vmem>>, %arg6: memref<8x5xf32, #tpu.memory_space<vmem>>, %arg7: memref<8x32xf32, #tpu.memory_space<vmem>>) attributes {dimension_semantics = [#tpu.dimension_semantics<parallel>], iteration_bounds = array<i64: 1>, scalar_prefetch = 0 : i64, scratch_operands = 0 : i64, tpu.core_type = #tpu.core_type<tc>, window_params = [{transform_indices = @transform_0, window_bounds = array<i64: 8, 32>}, {pipeline_mode = #tpu.pipeline_mode<synchronous>, transform_indices = @transform_1, window_bounds = array<i64: 32, 128>}, {pipeline_mode = #tpu.pipeline_mode<synchronous>, transform_indices = @transform_2, window_bounds = array<i64: 1, 128>}, {pipeline_mode = #tpu.pipeline_mode<synchronous>, transform_indices = @transform_3, window_bounds = array<i64: 128, 32>}, {pipeline_mode = #tpu.pipeline_mode<synchronous>, transform_indices = @transform_4, window_bounds = array<i64: 1, 32>}, {transform_indices = @transform_5, window_bounds = array<i64: 8, 5>}, {transform_indices = @transform_6, window_bounds = array<i64: 8, 32>}]} {
    %c0 = arith.constant 0 : index
    %c0_0 = arith.constant 0 : index
    %0 = vector.load %arg1[%c0, %c0_0] : memref<8x32xf32, #tpu.memory_space<vmem>>, vector<8x32xf32>
    %c0_1 = arith.constant 0 : index
    %c0_2 = arith.constant 0 : index
    %1 = vector.load %arg2[%c0_1, %c0_2] : memref<32x128xf32, #tpu.memory_space<vmem>>, vector<32x128xf32>
    %cst = arith.constant dense<0.000000e+00> : vector<8x128xf32>
    %2 = tpu.matmul %0, %1, %cst {dimension_numbers = #tpu.dot_dimension_numbers<[1], [0], [0], [1], [0, 0, 1, 1], [], []>} : vector<8x32xf32>, vector<32x128xf32>, vector<8x128xf32> -> vector<8x128xf32>
    %c0_3 = arith.constant 0 : index
    %c0_4 = arith.constant 0 : index
    %3 = vector.load %arg3[%c0_3, %c0_4] : memref<1x128xf32, #tpu.memory_space<vmem>>, vector<1x128xf32>
    %4 = vector.broadcast %3 : vector<1x128xf32> to vector<8x128xf32>
    %5 = arith.addf %2, %4 : vector<8x128xf32>
    %cst_5 = arith.constant 0.000000e+00 : f32
    %6 = vector.broadcast %cst_5 : f32 to vector<8x128xf32>
    %7 = arith.maximumf %5, %6 : vector<8x128xf32>
    %8 = vector.extract_strided_slice %7 {offsets = [0, 0], sizes = [8, 5], strides = [1, 1]} : vector<8x128xf32> to vector<8x5xf32>
    %c0_6 = arith.constant 0 : index
    %c0_7 = arith.constant 0 : index
    %9 = vector.load %arg6[%c0_6, %c0_7] : memref<8x5xf32, #tpu.memory_space<vmem>>, vector<8x5xf32>
    tpu.vector_store %arg6[%c0_6, %c0_7], %8 {strides = array<i32>} : memref<8x5xf32, #tpu.memory_space<vmem>>, vector<8x5xf32>,
    %c0_8 = arith.constant 0 : index
    %c0_9 = arith.constant 0 : index
    %10 = vector.load %arg4[%c0_8, %c0_9] : memref<128x32xf32, #tpu.memory_space<vmem>>, vector<128x32xf32>
    %cst_10 = arith.constant dense<0.000000e+00> : vector<8x32xf32>
    %11 = tpu.matmul %7, %10, %cst_10 {dimension_numbers = #tpu.dot_dimension_numbers<[1], [0], [0], [1], [0, 0, 1, 1], [], []>} : vector<8x128xf32>, vector<128x32xf32>, vector<8x32xf32> -> vector<8x32xf32>
    %c0_11 = arith.constant 0 : index
    %c0_12 = arith.constant 0 : index
    %12 = vector.load %arg5[%c0_11, %c0_12] : memref<1x32xf32, #tpu.memory_space<vmem>>, vector<1x32xf32>
    %13 = vector.broadcast %12 : vector<1x32xf32> to vector<8x32xf32>
    %14 = arith.addf %11, %13 : vector<8x32xf32>
    %15 = arith.negf %14 : vector<8x32xf32>
    %16 = math.exp %15 : vector<8x32xf32>
    %cst_13 = arith.constant 1.000000e+00 : f32
    %17 = vector.broadcast %cst_13 : f32 to vector<8x32xf32>
    %18 = arith.addf %17, %16 : vector<8x32xf32>
    %19 = arith.divf %17, %18 : vector<8x32xf32>
    %c0_14 = arith.constant 0 : index
    %c0_15 = arith.constant 0 : index
    %20 = vector.load %arg7[%c0_14, %c0_15] : memref<8x32xf32, #tpu.memory_space<vmem>>, vector<8x32xf32>
    tpu.vector_store %arg7[%c0_14, %c0_15], %19 {strides = array<i32>} : memref<8x32xf32, #tpu.memory_space<vmem>>, vector<8x32xf32>,
    return
  }
  func.func @transform_0(%arg0: i32) -> (i32, i32) {
    %c0_i32 = arith.constant 0 : i32
    %c0_i32_0 = arith.constant 0 : i32
    return %arg0, %c0_i32 : i32, i32
  }
  func.func @transform_1(%arg0: i32) -> (i32, i32) {
    %c0_i32 = arith.constant 0 : i32
    %c0_i32_0 = arith.constant 0 : i32
    %c0_i32_1 = arith.constant 0 : i32
    return %c0_i32, %c0_i32_0 : i32, i32
  }
  func.func @transform_2(%arg0: i32) -> (i32, i32) {
    %c0_i32 = arith.constant 0 : i32
    %c0_i32_0 = arith.constant 0 : i32
    %c0_i32_1 = arith.constant 0 : i32
    return %c0_i32, %c0_i32_0 : i32, i32
  }
  func.func @transform_3(%arg0: i32) -> (i32, i32) {
    %c0_i32 = arith.constant 0 : i32
    %c0_i32_0 = arith.constant 0 : i32
    %c0_i32_1 = arith.constant 0 : i32
    return %c0_i32, %c0_i32_0 : i32, i32
  }
  func.func @transform_4(%arg0: i32) -> (i32, i32) {
    %c0_i32 = arith.constant 0 : i32
    %c0_i32_0 = arith.constant 0 : i32
    %c0_i32_1 = arith.constant 0 : i32
    return %c0_i32, %c0_i32_0 : i32, i32
  }
  func.func @transform_5(%arg0: i32) -> (i32, i32) {
    %c0_i32 = arith.constant 0 : i32
    %c0_i32_0 = arith.constant 0 : i32
    return %arg0, %c0_i32 : i32, i32
  }
  func.func @transform_6(%arg0: i32) -> (i32, i32) {
    %c0_i32 = arith.constant 0 : i32
    %c0_i32_0 = arith.constant 0 : i32
    return %arg0, %c0_i32 : i32, i32
  }
}

</mosaic_0001>

<llo_original>
// kernel: tpu_custom_call.1
$region0: #{tpu_custom_call.1}
  #allocation0 [shape = 'u32[]', space=smem, size = 0x4, offset = 0x4, fixed_abs, tag = 'smem constant byte address 0x4 - core index']
  #allocation1 [shape = 'u32[144,128]{1,0:T(1,128)}', space=vmem, size = 0x12000, scoped, tag = 'internal scratch']
  %s0 = inlined_call_operand.vmem [shape: f32[8,32], index: 0, kind: input, shape index: {}]
  %s1 = inlined_call_operand.vmem [shape: f32[32,128], index: 1, kind: input, shape index: {}]
  %s2 = inlined_call_operand.vmem [shape: f32[1,128], index: 2, kind: input, shape index: {}]
  %s3 = inlined_call_operand.vmem [shape: f32[128,32], index: 3, kind: input, shape index: {}]
  %s4 = inlined_call_operand.vmem [shape: f32[1,32], index: 4, kind: input, shape index: {}]
  %s5 = inlined_call_operand.hbm [shape: f32[8,5], index: 5, kind: output, shape index: {0}]
  %s6 = inlined_call_operand.hbm [shape: f32[8,32], index: 6, kind: output, shape index: {1}]
  %7 = xla_tuple %s5, %s6
  %s8 = sld [smem:[#allocation0]]
  $region38: #{tpu_custom_call.1} parent=0
    _
  %s10 = ssub.s32 1, %s8
  %s11 = scalar_select 0, %s10, %s8
  $region1: #{tpu_custom_call.1} parent=0
    #allocation2 [shape = 'u8[4096]{0}', space=vmem, size = 0x1000, scoped, tag = 'output window, operand 0, single buffered']
    #allocation3 [shape = 's32[1]{0}', space=sflag, size = 0x4, scoped, tag = 'scoped memory for tpu_custom_call.1']
    #allocation4 [shape = 'u8[4096]{0}', space=vmem, size = 0x1000, scoped, tag = 'output window, operand 1, single buffered']
    #allocation5 [shape = 's32[1]{0}', space=sflag, size = 0x4, scoped, tag = 'scoped memory for tpu_custom_call.1']
    %12 = vsyncpa [#allocation3], 0
    %13 = vsyncpa [#allocation5], 0
    // Predicated region
    $region2: #{tpu_custom_call.1} parent=1 // pred_check
      _
    $region3: #{tpu_custom_call.1} parent=1 // pred_check_branch
      %15 = sbr.rel (0) target = $region5
    $region4: #{tpu_custom_call.1} parent=1 // pred_region
      _
    $region5: #{tpu_custom_call.1} parent=1 // pred_fallthru
      _
    // Predicated region
    $region6: #{tpu_custom_call.1} parent=1 // pred_check
      _
    $region7: #{tpu_custom_call.1} parent=1 // pred_check_branch
      %17 = sbr.rel (0) target = $region9
    $region8: #{tpu_custom_call.1} parent=1 // pred_region
      _
    $region9: #{tpu_custom_call.1} parent=1 // pred_fallthru
      _
    // Predicated region
    $region10: #{tpu_custom_call.1} parent=1 // pred_check
      _
    $region11: #{tpu_custom_call.1} parent=1 // pred_check_branch
      %19 = sbr.rel (0) target = $region13
    $region12: #{tpu_custom_call.1} parent=1 // pred_region
      _
    $region13: #{tpu_custom_call.1} parent=1 // pred_fallthru
      _
    // Predicated region
    $region14: #{tpu_custom_call.1} parent=1 // pred_check
      _
    $region15: #{tpu_custom_call.1} parent=1 // pred_check_branch
      %21 = sbr.rel (0) target = $region17
    $region16: #{tpu_custom_call.1} parent=1 // pred_region
      _
    $region17: #{tpu_custom_call.1} parent=1 // pred_fallthru
      _
    // Predicated region
    $region18: #{tpu_custom_call.1} parent=1 // pred_check
      _
    $region19: #{tpu_custom_call.1} parent=1 // pred_check_branch
      %23 = sbr.rel (0) target = $region21
    $region20: #{tpu_custom_call.1} parent=1 // pred_region
      _
    $region21: #{tpu_custom_call.1} parent=1 // pred_fallthru
      _
    %v24 = vld [vmem:[%s0] sm:$0xff]
    %v25 = vld [vmem:[%s1] sm:$0xff]
    %v26 = vld [vmem:[%s1 + $0x8] sm:$0xff]
    %v27 = vld [vmem:[%s1 + $0x10] sm:$0xff]
    %v28 = vld [vmem:[%s1 + $0x18] sm:$0xff]
    %v29 = vld [vmem:[%s2] sm:$0x1]
    %v31 = vlaneseq
    %v32 = vshrl.u32 %v31, 7
    %v33 = vsub.s32 0, %v32
    %v34 = vrot.slane %v29, %v33
    %vm36 = vcmask 261120
    %v38 = vsel %vm36, %v24, 0
    %40 = vmatprep.subr.mxu0 0.0
    %41 = vmatpush1.msra.mxu0 %v25
    %42 = vmatprep.subr.mxu0 0.0
    %43 = vmatpush1.msra.mxu0 %v26
    %44 = vmatprep.subr.mxu0 0.0
    %45 = vmatpush1.msra.mxu0 %v27
    %46 = vmatprep.subr.mxu0 0.0
    %47 = vmatpush1.msra.mxu0 %v28
    %48 = vmatprep.subr.mxu0 0.0
    %49 = vmatpush1.msra.mxu0 0.0
    %50 = vmatprep.subr.mxu0 0.0
    %51 = vmatpush1.msra.mxu0 0.0
    %52 = vmatprep.subr.mxu0 0.0
    %53 = vmatpush1.msra.mxu0 0.0
    %54 = vmatprep.subr.mxu0 0.0
    %55 = vmatpush1.msra.mxu0 0.0
    %56 = vmatprep.subr.mxu0 0.0
    %57 = vmatpush1.msra.mxu0 0.0
    %58 = vmatprep.subr.mxu0 0.0
    %59 = vmatpush1.msra.mxu0 0.0
    %60 = vmatprep.subr.mxu0 0.0
    %61 = vmatpush1.msra.mxu0 0.0
    %62 = vmatprep.subr.mxu0 0.0
    %63 = vmatpush1.msra.mxu0 0.0
    %64 = vmatprep.subr.mxu0 0.0
    %65 = vmatpush1.msra.mxu0 0.0
    %66 = vmatprep.subr.mxu0 0.0
    %67 = vmatpush1.msra.mxu0 0.0
    %68 = vmatprep.subr.mxu0 0.0
    %69 = vmatpush1.msra.mxu0 0.0
    %70 = vmatprep.subr.mxu0 0.0
    %71 = vmatpush1.msra.mxu0 0.0
    %72 = vmatprep.subr.mxu0 0.0
    %73 = vmatpush1.msra.mxu0 0.0
    %74 = vmatprep.subr.mxu0 0.0
    %75 = vmatpush1.msra.mxu0 0.0
    %76 = vmatprep.subr.mxu0 0.0
    %77 = vmatpush1.msra.mxu0 0.0
    %78 = vmatprep.subr.mxu0 0.0
    %79 = vmatpush1.msra.mxu0 0.0
    %80 = vmatprep.subr.mxu0 0.0
    %81 = vmatpush1.msra.mxu0 0.0
    %82 = vmatprep.subr.mxu0 0.0
    %83 = vmatpush1.msra.mxu0 0.0
    %84 = vmatprep.subr.mxu0 0.0
    %85 = vmatpush1.msra.mxu0 0.0
    %86 = vmatprep.subr.mxu0 0.0
    %87 = vmatpush1.msra.mxu0 0.0
    %88 = vmatprep.subr.mxu0 0.0
    %89 = vmatpush1.msra.mxu0 0.0
    %90 = vmatprep.subr.mxu0 0.0
    %91 = vmatpush1.msra.mxu0 0.0
    %92 = vmatprep.subr.mxu0 0.0
    %93 = vmatpush1.msra.mxu0 0.0
    %94 = vmatprep.subr.mxu0 0.0
    %95 = vmatpush1.msra.mxu0 0.0
    %96 = vmatprep.subr.mxu0 0.0
    %97 = vmatpush1.msra.mxu0 0.0
    %98 = vmatprep.subr.mxu0 0.0
    %99 = vmatpush1.msra.mxu0 0.0
    %100 = vmatprep.subr.mxu0 0.0
    %101 = vmatpush1.msra.mxu0 0.0
    %102 = vmatprep.subr.mxu0 0.0
    %103 = vmatpush1.msra.mxu0 0.0
    %104 = vmatprep.mubr.f32.mxu0 0.0
    %105 = vmatmul.mubr.f32.gmra.mrb[0].mxu0 %v38
    %v106 = vpop.f32.mrb[0].mxu0
    %v107 = vadd.f32 %v34, %v106
    %v108 = vpop.f32.mrb[0].mxu0
    %109 = vdwg.mxu0
    %v110 = vmax.f32 %v107, 0.0
    %vm111 = vcmask 39936
    %112 = vst.msk [vmem:[#allocation2] sm:$0xff] %vm111, %v110
    %v113 = vld [vmem:[%s3] sm:$0xff]
    %v114 = vld [vmem:[%s3 + $0x8] sm:$0xff]
    %v115 = vld [vmem:[%s3 + $0x10] sm:$0xff]
    %v116 = vld [vmem:[%s3 + $0x18] sm:$0xff]
    %v117 = vld [vmem:[%s3 + $0x20] sm:$0xff]
    %v118 = vld [vmem:[%s3 + $0x28] sm:$0xff]
    %v119 = vld [vmem:[%s3 + $0x30] sm:$0xff]
    %v120 = vld [vmem:[%s3 + $0x38] sm:$0xff]
    %v121 = vld [vmem:[%s3 + $0x40] sm:$0xff]
    %v122 = vld [vmem:[%s3 + $0x48] sm:$0xff]
    %v123 = vld [vmem:[%s3 + $0x50] sm:$0xff]
    %v124 = vld [vmem:[%s3 + $0x58] sm:$0xff]
    %v125 = vld [vmem:[%s3 + $0x60] sm:$0xff]
    %v126 = vld [vmem:[%s3 + $0x68] sm:$0xff]
    %v127 = vld [vmem:[%s3 + $0x70] sm:$0xff]
    %v128 = vld [vmem:[%s3 + $0x78] sm:$0xff]
    %v129 = vld [vmem:[%s4] sm:$0x1]
    %v131 = vlaneseq
    %v132 = vshrl.u32 %v131, 7
    %v133 = vsub.s32 0, %v132
    %v134 = vrot.slane %v129, %v133
    %136 = vmatprep.subr.mxu0 0.0
    %137 = vmatpush1.msra.mxu0 %v113
    %138 = vmatprep.subr.mxu0 0.0
    %139 = vmatpush1.msra.mxu0 %v114
    %140 = vmatprep.subr.mxu0 0.0
    %141 = vmatpush1.msra.mxu0 %v115
    %142 = vmatprep.subr.mxu0 0.0
    %143 = vmatpush1.msra.mxu0 %v116
    %144 = vmatprep.subr.mxu0 0.0
    %145 = vmatpush1.msra.mxu0 %v117
    %146 = vmatprep.subr.mxu0 0.0
    %147 = vmatpush1.msra.mxu0 %v118
    %148 = vmatprep.subr.mxu0 0.0
    %149 = vmatpush1.msra.mxu0 %v119
    %150 = vmatprep.subr.mxu0 0.0
    %151 = vmatpush1.msra.mxu0 %v120
    %152 = vmatprep.subr.mxu0 0.0
    %153 = vmatpush1.msra.mxu0 %v121
    %154 = vmatprep.subr.mxu0 0.0
    %155 = vmatpush1.msra.mxu0 %v122
    %156 = vmatprep.subr.mxu0 0.0
    %157 = vmatpush1.msra.mxu0 %v123
    %158 = vmatprep.subr.mxu0 0.0
    %159 = vmatpush1.msra.mxu0 %v124
    %160 = vmatprep.subr.mxu0 0.0
    %161 = vmatpush1.msra.mxu0 %v125
    %162 = vmatprep.subr.mxu0 0.0
    %163 = vmatpush1.msra.mxu0 %v126
    %164 = vmatprep.subr.mxu0 0.0
    %165 = vmatpush1.msra.mxu0 %v127
    %166 = vmatprep.subr.mxu0 0.0
    %167 = vmatpush1.msra.mxu0 %v128
    %168 = vmatprep.subr.mxu0 0.0
    %169 = vmatpush1.msra.mxu0 0.0
    %170 = vmatprep.subr.mxu0 0.0
    %171 = vmatpush1.msra.mxu0 0.0
    %172 = vmatprep.subr.mxu0 0.0
    %173 = vmatpush1.msra.mxu0 0.0
    %174 = vmatprep.subr.mxu0 0.0
    %175 = vmatpush1.msra.mxu0 0.0
    %176 = vmatprep.subr.mxu0 0.0
    %177 = vmatpush1.msra.mxu0 0.0
    %178 = vmatprep.subr.mxu0 0.0
    %179 = vmatpush1.msra.mxu0 0.0
    %180 = vmatprep.subr.mxu0 0.0
    %181 = vmatpush1.msra.mxu0 0.0
    %182 = vmatprep.subr.mxu0 0.0
    %183 = vmatpush1.msra.mxu0 0.0
    %184 = vmatprep.subr.mxu0 0.0
    %185 = vmatpush1.msra.mxu0 0.0
    %186 = vmatprep.subr.mxu0 0.0
    %187 = vmatpush1.msra.mxu0 0.0
    %188 = vmatprep.subr.mxu0 0.0
    %189 = vmatpush1.msra.mxu0 0.0
    %190 = vmatprep.subr.mxu0 0.0
    %191 = vmatpush1.msra.mxu0 0.0
    %192 = vmatprep.subr.mxu0 0.0
    %193 = vmatpush1.msra.mxu0 0.0
    %194 = vmatprep.subr.mxu0 0.0
    %195 = vmatpush1.msra.mxu0 0.0
    %196 = vmatprep.subr.mxu0 0.0
    %197 = vmatpush1.msra.mxu0 0.0
    %198 = vmatprep.subr.mxu0 0.0
    %199 = vmatpush1.msra.mxu0 0.0
    %200 = vmatprep.mubr.f32.mxu0 0.0
    %201 = vmatmul.mubr.f32.gmra.mrb[0].mxu0 %v110
    %v202 = vpop.f32.mrb[0].mxu0
    %v203 = vadd.f32 %v134, %v202
    %v204 = vpop.f32.mrb[0].mxu0
    %205 = vdwg.mxu0
    %v206 = vxor.u32 %v203, 2147483648
    %v207 = vmul.f32 %v206, 1.442695
    %v208 = vpow.pop %v207
    %v209 = vadd.f32 %v208, 1.0
    %v210 = vrcp.pop %v209
    %v211 = vmul.f32 1.0, %v210
    %212 = vst.msk [vmem:[#allocation4] sm:$0xff] %vm36, %v211
    // Predicated region
    $region22: #{tpu_custom_call.1} parent=1 // pred_check
      _
    $region23: #{tpu_custom_call.1} parent=1 // pred_check_branch
      %214 = sbr.rel (0) target = $region25
    $region24: #{tpu_custom_call.1} parent=1 // pred_region
      %s216 = ssub.s32 128, 128
      %217 = vsyncadd [#allocation3], %s216
      %s219 = sshll.u32 [#allocation2], 4
      %s220 = int_to_ptr.vmem [resolvable:$true] %s219
      %222 = dma.vmem_to_hbm [thread:$0]  %s220, 128, %s5, [#allocation3]
    $region25: #{tpu_custom_call.1} parent=1 // pred_fallthru
      _
    // Predicated region
    $region26: #{tpu_custom_call.1} parent=1 // pred_check
      _
    $region27: #{tpu_custom_call.1} parent=1 // pred_check_branch
      %224 = sbr.rel (0) target = $region29
    $region28: #{tpu_custom_call.1} parent=1 // pred_region
      %s226 = ssub.s32 128, 128
      %227 = vsyncadd [#allocation5], %s226
      %s229 = sshll.u32 [#allocation4], 4
      %s230 = int_to_ptr.vmem [resolvable:$true] %s229
      %232 = dma.vmem_to_hbm [thread:$0]  %s230, 128, %s6, [#allocation5]
    $region29: #{tpu_custom_call.1} parent=1 // pred_fallthru
      _
    // Predicated region
    $region30: #{tpu_custom_call.1} parent=1 // pred_check
      _
    $region31: #{tpu_custom_call.1} parent=1 // pred_check_branch
      %234 = sbr.rel (0) target = $region33
    $region32: #{tpu_custom_call.1} parent=1 // pred_region
      %235 = dma.done [#allocation3], 128
    $region33: #{tpu_custom_call.1} parent=1 // pred_fallthru
      _
    // Predicated region
    $region34: #{tpu_custom_call.1} parent=1 // pred_check
      _
    $region35: #{tpu_custom_call.1} parent=1 // pred_check_branch
      %237 = sbr.rel (0) target = $region37
    $region36: #{tpu_custom_call.1} parent=1 // pred_region
      %238 = dma.done [#allocation5], 128
    $region37: #{tpu_custom_call.1} parent=1 // pred_fallthru
      _
    %239 = vsyncpa [#allocation3], 1
    %240 = vsyncpa [#allocation5], 1

</llo_original>
